<compile_context>
chip_gen: v5e
topology: v5e:2x2
jax: 0.10.0
libtpu: 0.0.40
codegen_flags: <defaults>
</compile_context>

<pallas_src>
import functools

import jax
import jax.numpy as jnp
from jax.experimental import pallas as pl
from jax.experimental.pallas import tpu as pltpu

FOCAL_LENGTH = 5000.0


# ---------------------------------------------------------------------------
# Fused kernel: keypoint projection + box conversion/scaling + camera
# translation, for the S selected queries only, in a single grid step.
# ---------------------------------------------------------------------------
def _postprocess_kernel(nb, kp3d_ref, cam_ref, slab_ref, cc_ref,
                        kp2d_ref, slab_o_ref):
    # kp3d_ref : (B, 3, S, K)  selected 3D keypoints, channels-first
    # cam_ref  : (B, S, 3)     selected weak-perspective cameras [s, tx, ty]
    # slab_ref : (B, 3, L)     lane-dense slab (see module header)
    # cc_ref   : (B, 2, 1, 1)  camera centers (W/2, H/2)
    # kp2d_ref : (B, 2, S, K)  projected keypoints (u-plane, v-plane)
    # slab_o   : (B, L)        [xyxy*scale (nb lanes) | transl (3S lanes) | 0]

    # ---- weak-perspective camera -> perspective projection -----------------
    cam = cam_ref[...]                          # (B, S, 3)
    s = cam[..., 0:1] + 1e-9                    # (B, S, 1)
    inv_s = 1.0 / s                             # exact (approx rcp was ~px error)
    dx = cam[..., 1:2] * inv_s                  # tx / s
    dy = cam[..., 2:3] * inv_s                  # ty / s

    kp3d = kp3d_ref[...]                        # (B, 3, S, K)
    x = kp3d[:, 0]                              # (B, S, K)
    y = kp3d[:, 1]
    z = kp3d[:, 2]
    inv_z = 1.0 / (z + inv_s)                   # exact

    cc = cc_ref[...]                            # (B, 2, 1, 1)
    # two dense all-batch stores (no per-batch loop, no SMEM scalars)
    kp2d_ref[:, 0, :, :] = (x + dx) * inv_z * FOCAL_LENGTH + cc[:, 0]
    kp2d_ref[:, 1, :, :] = (y + dy) * inv_z * FOCAL_LENGTH + cc[:, 1]

    # ---- boxes (cxcywh -> xyxy, * scale) + camera translation: ONE dense store
    slab = slab_ref[...]                        # (B, 3, L)
    row0 = slab[:, 0]                           # centers / numerators
    row1 = slab[:, 1]                           # extents (0 outside box lanes)
    row2 = slab[:, 2]                           # scale (box lanes) / s (transl)
    lane = jax.lax.broadcasted_iota(jnp.int32, row0.shape, 1)
    sign = jnp.where(lane % 4 < 2, -0.5, 0.5)
    val = row0 + sign * row1                    # boxes: xyxy ; transl: [tx, ty, 1]
    slab_o_ref[...] = jnp.where(lane < nb, val * row2, val / row2)


def _fused_postprocess_call(kp3d_cf, cam_sel, slab_in, centers, nb):
    B, _, S, K = kp3d_cf.shape
    L = slab_in.shape[-1]
    return pl.pallas_call(
        functools.partial(_postprocess_kernel, nb),
        out_shape=(
            jax.ShapeDtypeStruct((B, 2, S, K), jnp.float32),
            jax.ShapeDtypeStruct((B, L), jnp.float32),
        ),
        grid=(1,),
        in_specs=[
            pl.BlockSpec((B, 3, S, K), lambda i: (0, 0, 0, 0)),
            pl.BlockSpec((B, S, 3), lambda i: (0, 0, 0)),
            pl.BlockSpec((B, 3, L), lambda i: (0, 0, 0)),
            pl.BlockSpec((B, 2, 1, 1), lambda i: (0, 0, 0, 0)),
        ],
        out_specs=(
            pl.BlockSpec((B, 2, S, K), lambda i: (0, 0, 0, 0)),
            pl.BlockSpec((B, L), lambda i: (0, 0)),
        ),
        # Single step; don't shard across TensorCores.  On v7x with realistic
        # batch sizes switch to grid=(B,) + ("parallel",) instead.
        compiler_params=pltpu.CompilerParams(
            dimension_semantics=("arbitrary",)),
    )(kp3d_cf, cam_sel, slab_in, centers)


# ---------------------------------------------------------------------------
# Jitted core: top-k + gathers + layout plumbing + fused Pallas kernel.
# ---------------------------------------------------------------------------
@functools.partial(jax.jit, static_argnames=("num_select",))
def _postprocess_core(outputs, target_sizes, img_shape, *, num_select):
    logits = outputs['pred_logits']
    B, Q, C = logits.shape
    S = num_select

    # top-k on raw logits (sigmoid is monotonic); sigmoid only the S winners.
    topk_logits, topk_idx = jax.lax.top_k(logits.reshape(B, Q * C), S)
    scores = jax.nn.sigmoid(topk_logits.astype(jnp.float32))
    topk_q = (topk_idx // C).astype(jnp.int32)
    labels = topk_idx % C

    # query gathers = pure memory movement -> plain XLA glue (fused under jit).
    gidx2 = topk_q[:, :, None]
    gidx4 = topk_q[:, :, None, None]
    take2 = lambda a: jnp.take_along_axis(a, gidx2, axis=1)
    take4 = lambda a: jnp.take_along_axis(a, gidx4, axis=1)

    cam_sel = take2(outputs['pred_smpl_cam']).astype(jnp.float32)       # (B, S, 3)
    smpl_kp3d = take4(outputs['pred_smpl_kp3d'])                        # (B, S, K, 3)
    smpl_verts = take4(outputs['pred_smpl_verts'])
    smpl_pose = take2(outputs['pred_smpl_fullpose'])
    smpl_beta = take2(outputs['pred_smpl_beta'])
    smpl_expr = take2(outputs['pred_smpl_expr'])

    boxes_all = jnp.concatenate(
        [take2(outputs['pred_boxes']),
         take2(outputs['pred_lhand_boxes']),
         take2(outputs['pred_rhand_boxes']),
         take2(outputs['pred_face_boxes'])], axis=1).astype(jnp.float32)  # (B,4S,4)

    ts = target_sizes.astype(jnp.float32)
    img_h, img_w = ts[:, 0], ts[:, 1]
    scale4 = jnp.stack([img_w, img_h, img_w, img_h], axis=1)              # (B, 4)

    # --- lane-dense slab (layout plumbing only; arithmetic stays in kernel) ---
    NB, NT = 16 * S, 3 * S
    L = 128 * pl.cdiv(NB + NT, 128)
    padn = L - NB - NT

    cxcy, wh = boxes_all[..., :2], boxes_all[..., 2:]
    row0_box = jnp.concatenate([cxcy, cxcy], -1).reshape(B, NB)           # cx,cy,cx,cy
    row1_box = jnp.concatenate([wh, wh], -1).reshape(B, NB)               # w,h,w,h
    row2_box = jnp.broadcast_to(scale4[:, None, :], (B, 4 * S, 4)).reshape(B, NB)

    s_col = cam_sel[..., 0:1] + 1e-9                                      # (B, S, 1)
    row0_tr = jnp.concatenate([cam_sel[..., 1:3], jnp.ones_like(s_col)],
                              axis=-1).reshape(B, NT)                     # tx,ty,1
    row1_tr = jnp.zeros((B, NT), jnp.float32)
    row2_tr = jnp.broadcast_to(s_col, (B, S, 3)).reshape(B, NT)           # s,s,s

    zpad = jnp.zeros((B, padn), jnp.float32)
    opad = jnp.ones((B, padn), jnp.float32)
    slab_in = jnp.stack([
        jnp.concatenate([row0_box, row0_tr, zpad], axis=-1),
        jnp.concatenate([row1_box, row1_tr, zpad], axis=-1),
        jnp.concatenate([row2_box, row2_tr, opad], axis=-1)], axis=1)     # (B,3,L)

    # camera_center = flip(img_shape)/2 = (W/2, H/2), dense (B,2,1,1) input
    ishape = img_shape.astype(jnp.float32)                                # (B,2)=(H,W)
    centers = (0.5 * jnp.stack([ishape[:, 1], ishape[:, 0]],
                               axis=1))[:, :, None, None]                 # (B,2,1,1)

    # tiny selected-queries-only transpose to channels-first
    kp3d_cf = jnp.transpose(smpl_kp3d, (0, 3, 1, 2)).astype(jnp.float32)  # (B,3,S,K)

    kp2d_cf, slab_out = _fused_postprocess_call(kp3d_cf, cam_sel, slab_in,
                                                centers, NB)

    pred_smpl_kp2d = jnp.transpose(kp2d_cf, (0, 2, 3, 1))                 # (B,S,K,2)
    boxes_xyxy = slab_out[:, :NB].reshape(B, 4, S, 4)                     # body|lh|rh|face
    transl = slab_out[:, NB:NB + NT].reshape(B, S, 3)                     # [dx,dy,1/s]

    return {
        'scores': scores,
        'labels': labels,
        'smpl_kp3d': smpl_kp3d,
        'smplx_root_pose': smpl_pose[:, :, :3],
        'smplx_body_pose': smpl_pose[:, :, 3:66],
        'smplx_lhand_pose': smpl_pose[:, :, 66:111],
        'smplx_rhand_pose': smpl_pose[:, :, 111:156],
        'smplx_jaw_pose': smpl_pose[:, :, 156:],
        'smplx_shape': smpl_beta,
        'smplx_expr': smpl_expr,
        'smplx_joint_proj': pred_smpl_kp2d,
        'smpl_verts': smpl_verts,
        'cam_trans': transl,
        'body_bbox': boxes_xyxy[:, 0],
        'lhand_bbox': boxes_xyxy[:, 1],
        'rhand_bbox': boxes_xyxy[:, 2],
        'face_bbox': boxes_xyxy[:, 3],
    }


# ---------------------------------------------------------------------------
# Full forward (per-sample dict assembly outside the jit, like the torch module).
# ---------------------------------------------------------------------------
def postprocess_smplx_multi_infer_box(outputs, target_sizes, data_batch_nc,
                                      num_select=8):
    batched = _postprocess_core(outputs, target_sizes,
                                data_batch_nc['img_shape'],
                                num_select=num_select)
    B = outputs['pred_logits'].shape[0]
    results = []
    for bs in range(B):
        r = {k: v[bs] for k, v in batched.items()}
        r.update({
            'image_idx': data_batch_nc['ann_idx'][bs],
            'bb2img_trans': data_batch_nc['bb2img_trans'][bs],
            'img2bb_trans': data_batch_nc['img2bb_trans'][bs],
            'img': data_batch_nc['img'][bs],
            'img_shape': data_batch_nc['img_shape'][bs],
        })
        results.append(r)
    return results


# ---------------------------------------------------------------------------
# Plain-JAX references for numerical sanity checks (mirror the torch ordering:
# project ALL queries, then gather; convert ALL boxes, then gather+scale).
# ---------------------------------------------------------------------------
def _ref_project(kp3d, cam, img_shape):
    s = cam[..., 0:1] + 1e-9
    transl = jnp.concatenate([cam[..., 1:2] / s, cam[..., 2:3] / s, 1.0 / s], -1)
    p = kp3d + transl[:, :, None, :]
    proj = p[..., :2] / p[..., 2:3] * FOCAL_LENGTH
    cc = jnp.flip(img_shape, -1) * 0.5
    return proj + cc[:, None, None, :]


def _ref_boxes(box_cxcywh, topk_q, scale_fct4):
    xy0 = box_cxcywh[..., :2] - 0.5 * box_cxcywh[..., 2:]
    xy1 = box_cxcywh[..., :2] + 0.5 * box_cxcywh[..., 2:]
    xyxy = jnp.concatenate([xy0, xy1], -1)
    g = jnp.take_along_axis(xyxy, topk_q[:, :, None], axis=1)
    return g * scale_fct4[:, None, :]


if __name__ == "__main__":
    key = jax.random.PRNGKey(0)
    B, Q, C = 2, 16, 4          # batch, num queries, num classes
    S = 8                       # num_select (small)
    K = 144                     # SMPL-X keypoints (hard-coded 144 in the module)
    V = 32                      # small vertex count
    keys = jax.random.split(key, 12)

    outputs = {
        'pred_logits': jax.random.normal(keys[0], (B, Q, C), jnp.float32),
        'pred_boxes': jax.random.uniform(keys[1], (B, Q, 4), jnp.float32, 0.1, 0.9),
        'pred_lhand_boxes': jax.random.uniform(keys[2], (B, Q, 4), jnp.float32, 0.1, 0.9),
        'pred_rhand_boxes': jax.random.uniform(keys[3], (B, Q, 4), jnp.float32, 0.1, 0.9),
        'pred_face_boxes': jax.random.uniform(keys[4], (B, Q, 4), jnp.float32, 0.1, 0.9),
        'pred_smpl_fullpose': jax.random.normal(keys[5], (B, Q, 159), jnp.float32) * 0.1,
        'pred_smpl_beta': jax.random.normal(keys[6], (B, Q, 10), jnp.float32),
        'pred_smpl_expr': jax.random.normal(keys[7], (B, Q, 10), jnp.float32),
        'pred_smpl_cam': jnp.concatenate(
            [jax.random.uniform(keys[8], (B, Q, 1), jnp.float32, 0.6, 1.4),   # s > 0
             jax.random.normal(keys[9], (B, Q, 2), jnp.float32) * 0.1], -1),
        'pred_smpl_kp3d': jax.random.normal(keys[10], (B, Q, K, 3), jnp.float32) * 0.1,
        'pred_smpl_verts': jax.random.normal(keys[11], (B, Q, V, 3), jnp.float32) * 0.1,
    }
    target_sizes = jnp.array([[480.0, 640.0], [512.0, 384.0]], jnp.float32)  # (H, W)
    data_batch_nc = {
        'img_shape': target_sizes,
        'bb2img_trans': jnp.tile(jnp.eye(2, 3, dtype=jnp.float32)[None], (B, 1, 1)),
        'img2bb_trans': jnp.tile(jnp.eye(2, 3, dtype=jnp.float32)[None], (B, 1, 1)),
        'img': jnp.zeros((B, 3, 8, 8), jnp.float32),
        'ann_idx': jnp.arange(B, dtype=jnp.int32),
    }

    results = postprocess_smplx_multi_infer_box(
        outputs, target_sizes, data_batch_nc, num_select=S)
    jax.block_until_ready(results)

    # -------------------- sanity checks vs plain-JAX references --------------
    prob_ref = jax.nn.sigmoid(outputs['pred_logits'])
    ref_scores, ref_idx = jax.lax.top_k(prob_ref.reshape(B, Q * C), S)
    ref_q = (ref_idx // C).astype(jnp.int32)
    ref_labels = ref_idx % C

    got_scores = jnp.stack([r['scores'] for r in results])
    got_labels = jnp.stack([r['labels'] for r in results])
    assert jnp.allclose(got_scores, ref_scores, rtol=1e-5, atol=1e-6), "scores mismatch"
    assert jnp.array_equal(got_labels, ref_labels), "labels mismatch"

    # projection (project all queries then gather, like torch)
    ref_kp2d_all = _ref_project(outputs['pred_smpl_kp3d'], outputs['pred_smpl_cam'],
                                data_batch_nc['img_shape'])
    ref_kp2d = jnp.take_along_axis(ref_kp2d_all, ref_q[:, :, None, None], axis=1)
    got_kp2d = jnp.stack([r['smplx_joint_proj'] for r in results])
    assert jnp.allclose(got_kp2d, ref_kp2d, rtol=5e-5, atol=5e-3), "projection mismatch"

    # boxes (all 4 heads)
    img_h, img_w = target_sizes[:, 0], target_sizes[:, 1]
    scale4 = jnp.stack([img_w, img_h, img_w, img_h], axis=1)
    for out_key, res_key in (('pred_boxes', 'body_bbox'),
                             ('pred_lhand_boxes', 'lhand_bbox'),
                             ('pred_rhand_boxes', 'rhand_bbox'),
                             ('pred_face_boxes', 'face_bbox')):
        got = jnp.stack([r[res_key] for r in results])
        ref = _ref_boxes(outputs[out_key], ref_q, scale4)
        assert jnp.allclose(got, ref, rtol=1e-5, atol=1e-3), f"{res_key} mismatch"

    # camera translation
    cam_g = jnp.take_along_axis(outputs['pred_smpl_cam'], ref_q[:, :, None], axis=1)
    s = cam_g[..., 0] + 1e-9
    ref_transl = jnp.stack([cam_g[..., 1] / s, cam_g[..., 2] / s, 1.0 / s], -1)
    got_transl = jnp.stack([r['cam_trans'] for r in results])
    assert jnp.allclose(got_transl, ref_transl, rtol=1e-5, atol=1e-5), "transl mismatch"

    print("KERNEL_OK")
</pallas_src>

<mosaic_0001>
module attributes {stable_mosaic.version = 11 : i64} {
  func.func @_postprocess_kernel(%arg0: i32, %arg1: memref<2x3x8x144xf32, #tpu.memory_space<vmem>>, %arg2: memref<2x8x3xf32, #tpu.memory_space<vmem>>, %arg3: memref<2x3x256xf32, #tpu.memory_space<vmem>>, %arg4: memref<2x2x1x1xf32, #tpu.memory_space<vmem>>, %arg5: memref<2x2x8x144xf32, #tpu.memory_space<vmem>>, %arg6: memref<2x256xf32, #tpu.memory_space<vmem>>) attributes {dimension_semantics = [#tpu.dimension_semantics<arbitrary>], iteration_bounds = array<i64: 1>, scalar_prefetch = 0 : i64, scratch_operands = 0 : i64, tpu.core_type = #tpu.core_type<tc>, window_params = [{pipeline_mode = #tpu.pipeline_mode<synchronous>, transform_indices = @transform_0, window_bounds = array<i64: 2, 3, 8, 144>}, {pipeline_mode = #tpu.pipeline_mode<synchronous>, transform_indices = @transform_1, window_bounds = array<i64: 2, 8, 3>}, {pipeline_mode = #tpu.pipeline_mode<synchronous>, transform_indices = @transform_2, window_bounds = array<i64: 2, 3, 256>}, {pipeline_mode = #tpu.pipeline_mode<synchronous>, transform_indices = @transform_3, window_bounds = array<i64: 2, 2, 1, 1>}, {pipeline_mode = #tpu.pipeline_mode<synchronous>, transform_indices = @transform_4, window_bounds = array<i64: 2, 2, 8, 144>}, {pipeline_mode = #tpu.pipeline_mode<synchronous>, transform_indices = @transform_5, window_bounds = array<i64: 2, 256>}]} {
    %c0 = arith.constant 0 : index
    %c0_0 = arith.constant 0 : index
    %c0_1 = arith.constant 0 : index
    %0 = vector.load %arg2[%c0, %c0_0, %c0_1] : memref<2x8x3xf32, #tpu.memory_space<vmem>>, vector<2x8x3xf32>
    %1 = vector.extract_strided_slice %0 {offsets = [0, 0, 0], sizes = [2, 8, 1], strides = [1, 1, 1]} : vector<2x8x3xf32> to vector<2x8x1xf32>
    %cst = arith.constant 9.99999971E-10 : f32
    %2 = vector.broadcast %cst : f32 to vector<2x8x1xf32>
    %3 = arith.addf %1, %2 : vector<2x8x1xf32>
    %cst_2 = arith.constant 1.000000e+00 : f32
    %4 = vector.broadcast %cst_2 : f32 to vector<2x8x1xf32>
    %5 = arith.divf %4, %3 : vector<2x8x1xf32>
    %6 = vector.extract_strided_slice %0 {offsets = [0, 0, 1], sizes = [2, 8, 1], strides = [1, 1, 1]} : vector<2x8x3xf32> to vector<2x8x1xf32>
    %7 = arith.mulf %6, %5 : vector<2x8x1xf32>
    %8 = vector.extract_strided_slice %0 {offsets = [0, 0, 2], sizes = [2, 8, 1], strides = [1, 1, 1]} : vector<2x8x3xf32> to vector<2x8x1xf32>
    %9 = arith.mulf %8, %5 : vector<2x8x1xf32>
    %c0_3 = arith.constant 0 : index
    %c0_4 = arith.constant 0 : index
    %c0_5 = arith.constant 0 : index
    %c0_6 = arith.constant 0 : index
    %10 = vector.load %arg1[%c0_3, %c0_4, %c0_5, %c0_6] : memref<2x3x8x144xf32, #tpu.memory_space<vmem>>, vector<2x3x8x144xf32>
    %11 = vector.extract_strided_slice %10 {offsets = [0, 0, 0, 0], sizes = [2, 1, 8, 144], strides = [1, 1, 1, 1]} : vector<2x3x8x144xf32> to vector<2x1x8x144xf32>
    %12 = vector.shape_cast %11 : vector<2x1x8x144xf32> to vector<2x8x144xf32>
    %13 = vector.extract_strided_slice %10 {offsets = [0, 1, 0, 0], sizes = [2, 1, 8, 144], strides = [1, 1, 1, 1]} : vector<2x3x8x144xf32> to vector<2x1x8x144xf32>
    %14 = vector.shape_cast %13 : vector<2x1x8x144xf32> to vector<2x8x144xf32>
    %15 = vector.extract_strided_slice %10 {offsets = [0, 2, 0, 0], sizes = [2, 1, 8, 144], strides = [1, 1, 1, 1]} : vector<2x3x8x144xf32> to vector<2x1x8x144xf32>
    %16 = vector.shape_cast %15 : vector<2x1x8x144xf32> to vector<2x8x144xf32>
    %17 = vector.broadcast %5 : vector<2x8x1xf32> to vector<2x8x144xf32>
    %18 = arith.addf %16, %17 : vector<2x8x144xf32>
    %cst_7 = arith.constant 1.000000e+00 : f32
    %19 = vector.broadcast %cst_7 : f32 to vector<2x8x144xf32>
    %20 = arith.divf %19, %18 : vector<2x8x144xf32>
    %c0_8 = arith.constant 0 : index
    %c0_9 = arith.constant 0 : index
    %c0_10 = arith.constant 0 : index
    %c0_11 = arith.constant 0 : index
    %21 = vector.load %arg4[%c0_8, %c0_9, %c0_10, %c0_11] : memref<2x2x1x1xf32, #tpu.memory_space<vmem>>, vector<2x2x1x1xf32>
    %22 = vector.broadcast %7 : vector<2x8x1xf32> to vector<2x8x144xf32>
    %23 = arith.addf %12, %22 : vector<2x8x144xf32>
    %24 = arith.mulf %23, %20 : vector<2x8x144xf32>
    %cst_12 = arith.constant 5.000000e+03 : f32
    %25 = vector.broadcast %cst_12 : f32 to vector<2x8x144xf32>
    %26 = arith.mulf %24, %25 : vector<2x8x144xf32>
    %27 = vector.extract_strided_slice %21 {offsets = [0, 0, 0, 0], sizes = [2, 1, 1, 1], strides = [1, 1, 1, 1]} : vector<2x2x1x1xf32> to vector<2x1x1x1xf32>
    %28 = vector.shape_cast %27 : vector<2x1x1x1xf32> to vector<2x1x1xf32>
    %29 = vector.broadcast %28 : vector<2x1x1xf32> to vector<2x8x144xf32>
    %30 = arith.addf %26, %29 : vector<2x8x144xf32>
    %c0_13 = arith.constant 0 : index
    %c0_14 = arith.constant 0 : index
    %c0_15 = arith.constant 0 : index
    %c0_16 = arith.constant 0 : index
    %31 = vector.load %arg5[%c0_13, %c0_14, %c0_15, %c0_16] : memref<2x2x8x144xf32, #tpu.memory_space<vmem>>, vector<2x1x8x144xf32>
    %32 = vector.shape_cast %31 : vector<2x1x8x144xf32> to vector<2x8x144xf32>
    %33 = vector.shape_cast %30 : vector<2x8x144xf32> to vector<2x1x8x144xf32>
    tpu.vector_store %arg5[%c0_13, %c0_14, %c0_15, %c0_16], %33 {strides = array<i32>} : memref<2x2x8x144xf32, #tpu.memory_space<vmem>>, vector<2x1x8x144xf32>,
    %34 = vector.broadcast %9 : vector<2x8x1xf32> to vector<2x8x144xf32>
    %35 = arith.addf %14, %34 : vector<2x8x144xf32>
    %36 = arith.mulf %35, %20 : vector<2x8x144xf32>
    %cst_17 = arith.constant 5.000000e+03 : f32
    %37 = vector.broadcast %cst_17 : f32 to vector<2x8x144xf32>
    %38 = arith.mulf %36, %37 : vector<2x8x144xf32>
    %39 = vector.extract_strided_slice %21 {offsets = [0, 1, 0, 0], sizes = [2, 1, 1, 1], strides = [1, 1, 1, 1]} : vector<2x2x1x1xf32> to vector<2x1x1x1xf32>
    %40 = vector.shape_cast %39 : vector<2x1x1x1xf32> to vector<2x1x1xf32>
    %41 = vector.broadcast %40 : vector<2x1x1xf32> to vector<2x8x144xf32>
    %42 = arith.addf %38, %41 : vector<2x8x144xf32>
    %c0_18 = arith.constant 0 : index
    %c1 = arith.constant 1 : index
    %c0_19 = arith.constant 0 : index
    %c0_20 = arith.constant 0 : index
    %43 = vector.load %arg5[%c0_18, %c1, %c0_19, %c0_20] : memref<2x2x8x144xf32, #tpu.memory_space<vmem>>, vector<2x1x8x144xf32>
    %44 = vector.shape_cast %43 : vector<2x1x8x144xf32> to vector<2x8x144xf32>
    %45 = vector.shape_cast %42 : vector<2x8x144xf32> to vector<2x1x8x144xf32>
    tpu.vector_store %arg5[%c0_18, %c1, %c0_19, %c0_20], %45 {strides = array<i32>} : memref<2x2x8x144xf32, #tpu.memory_space<vmem>>, vector<2x1x8x144xf32>,
    %c0_21 = arith.constant 0 : index
    %c0_22 = arith.constant 0 : index
    %c0_23 = arith.constant 0 : index
    %46 = vector.load %arg3[%c0_21, %c0_22, %c0_23] : memref<2x3x256xf32, #tpu.memory_space<vmem>>, vector<2x3x256xf32>
    %47 = vector.extract_strided_slice %46 {offsets = [0, 0, 0], sizes = [2, 1, 256], strides = [1, 1, 1]} : vector<2x3x256xf32> to vector<2x1x256xf32>
    %48 = vector.shape_cast %47 : vector<2x1x256xf32> to vector<2x256xf32>
    %49 = vector.extract_strided_slice %46 {offsets = [0, 1, 0], sizes = [2, 1, 256], strides = [1, 1, 1]} : vector<2x3x256xf32> to vector<2x1x256xf32>
    %50 = vector.shape_cast %49 : vector<2x1x256xf32> to vector<2x256xf32>
    %51 = vector.extract_strided_slice %46 {offsets = [0, 2, 0], sizes = [2, 1, 256], strides = [1, 1, 1]} : vector<2x3x256xf32> to vector<2x1x256xf32>
    %52 = vector.shape_cast %51 : vector<2x1x256xf32> to vector<2x256xf32>
    %53 = tpu.iota {dimensions = array<i32: 1>} : vector<2x256xi32>
    %c4_i32 = arith.constant 4 : i32
    %c0_i32 = arith.constant 0 : i32
    %54 = arith.cmpi eq, %c4_i32, %c0_i32 : i32
    %c1_i32 = arith.constant 1 : i32
    %55 = arith.select %54, %c1_i32, %c4_i32 : i32
    %56 = vector.broadcast %55 : i32 to vector<2x256xi32>
    %57 = arith.remsi %53, %56 : vector<2x256xi32>
    %c0_i32_24 = arith.constant 0 : i32
    %58 = vector.broadcast %c0_i32_24 : i32 to vector<2x256xi32>
    %59 = arith.cmpi ne, %57, %58 : vector<2x256xi32>
    %c0_i32_25 = arith.constant 0 : i32
    %60 = vector.broadcast %c0_i32_25 : i32 to vector<2x256xi32>
    %61 = arith.cmpi slt, %57, %60 : vector<2x256xi32>
    %c0_i32_26 = arith.constant 0 : i32
    %62 = arith.cmpi slt, %55, %c0_i32_26 : i32
    %63 = vector.broadcast %62 : i1 to vector<2x256xi1>
    %64 = vector.broadcast %63 : vector<2x256xi1> to vector<2x256xi1>
    %65 = arith.xori %61, %64 : vector<2x256xi1>
    %66 = arith.andi %65, %59 : vector<2x256xi1>
    %67 = vector.broadcast %55 : i32 to vector<2x256xi32>
    %68 = arith.addi %57, %67 : vector<2x256xi32>
    %69 = arith.select %66, %68, %57 : vector<2x256xi1>, vector<2x256xi32>
    %c2_i32 = arith.constant 2 : i32
    %70 = vector.broadcast %c2_i32 : i32 to vector<2x256xi32>
    %71 = arith.cmpi slt, %69, %70 : vector<2x256xi32>
    %cst_27 = arith.constant -5.000000e-01 : f32
    %cst_28 = arith.constant 5.000000e-01 : f32
    %72 = vector.broadcast %cst_27 : f32 to vector<2x256xf32>
    %73 = vector.broadcast %cst_28 : f32 to vector<2x256xf32>
    %74 = arith.select %71, %72, %73 : vector<2x256xi1>, vector<2x256xf32>
    %75 = arith.mulf %74, %50 : vector<2x256xf32>
    %76 = arith.addf %48, %75 : vector<2x256xf32>
    %c128_i32 = arith.constant 128 : i32
    %77 = vector.broadcast %c128_i32 : i32 to vector<2x256xi32>
    %78 = arith.cmpi slt, %53, %77 : vector<2x256xi32>
    %79 = arith.mulf %76, %52 : vector<2x256xf32>
    %80 = arith.divf %76, %52 : vector<2x256xf32>
    %81 = arith.select %78, %79, %80 : vector<2x256xi1>, vector<2x256xf32>
    %c0_29 = arith.constant 0 : index
    %c0_30 = arith.constant 0 : index
    %82 = vector.load %arg6[%c0_29, %c0_30] : memref<2x256xf32, #tpu.memory_space<vmem>>, vector<2x256xf32>
    tpu.vector_store %arg6[%c0_29, %c0_30], %81 {strides = array<i32>} : memref<2x256xf32, #tpu.memory_space<vmem>>, vector<2x256xf32>,
    return
  }
  func.func @transform_0(%arg0: i32) -> (i32, i32, i32, i32) {
    %c0_i32 = arith.constant 0 : i32
    %c0_i32_0 = arith.constant 0 : i32
    %c0_i32_1 = arith.constant 0 : i32
    %c0_i32_2 = arith.constant 0 : i32
    %c0_i32_3 = arith.constant 0 : i32
    return %c0_i32, %c0_i32_0, %c0_i32_1, %c0_i32_2 : i32, i32, i32, i32
  }
  func.func @transform_1(%arg0: i32) -> (i32, i32, i32) {
    %c0_i32 = arith.constant 0 : i32
    %c0_i32_0 = arith.constant 0 : i32
    %c0_i32_1 = arith.constant 0 : i32
    %c0_i32_2 = arith.constant 0 : i32
    return %c0_i32, %c0_i32_0, %c0_i32_1 : i32, i32, i32
  }
  func.func @transform_2(%arg0: i32) -> (i32, i32, i32) {
    %c0_i32 = arith.constant 0 : i32
    %c0_i32_0 = arith.constant 0 : i32
    %c0_i32_1 = arith.constant 0 : i32
    %c0_i32_2 = arith.constant 0 : i32
    return %c0_i32, %c0_i32_0, %c0_i32_1 : i32, i32, i32
  }
  func.func @transform_3(%arg0: i32) -> (i32, i32, i32, i32) {
    %c0_i32 = arith.constant 0 : i32
    %c0_i32_0 = arith.constant 0 : i32
    %c0_i32_1 = arith.constant 0 : i32
    %c0_i32_2 = arith.constant 0 : i32
    %c0_i32_3 = arith.constant 0 : i32
    return %c0_i32, %c0_i32_0, %c0_i32_1, %c0_i32_2 : i32, i32, i32, i32
  }
  func.func @transform_4(%arg0: i32) -> (i32, i32, i32, i32) {
    %c0_i32 = arith.constant 0 : i32
    %c0_i32_0 = arith.constant 0 : i32
    %c0_i32_1 = arith.constant 0 : i32
    %c0_i32_2 = arith.constant 0 : i32
    %c0_i32_3 = arith.constant 0 : i32
    return %c0_i32, %c0_i32_0, %c0_i32_1, %c0_i32_2 : i32, i32, i32, i32
  }
  func.func @transform_5(%arg0: i32) -> (i32, i32) {
    %c0_i32 = arith.constant 0 : i32
    %c0_i32_0 = arith.constant 0 : i32
    %c0_i32_1 = arith.constant 0 : i32
    return %c0_i32, %c0_i32_0 : i32, i32
  }
}

</mosaic_0001>

<llo_original>
// kernel: _postprocess_core.1
$region0: #{_postprocess_core.1}
  #allocation0 [shape = 'u32[]', space=smem, size = 0x4, offset = 0x4, fixed_abs, tag = 'smem constant byte address 0x4 - core index']
  #allocation1 [shape = 'u32[72,128]{1,0:T(1,128)}', space=vmem, size = 0x9000, scoped, tag = 'internal scratch']
  %s0 = inlined_call_operand.vmem [shape: f32[2,3,8,144], index: 0, kind: input, shape index: {}]
  %s1 = inlined_call_operand.vmem [shape: f32[2,8,3], index: 1, kind: input, shape index: {}]
  %s2 = inlined_call_operand.vmem [shape: f32[2,3,256], index: 2, kind: input, shape index: {}]
  %s3 = inlined_call_operand.vmem [shape: f32[2,2,1,1], index: 3, kind: input, shape index: {}]
  %s4 = inlined_call_operand.vmem [shape: f32[2,2,8,144], index: 4, kind: output, shape index: {0}]
  %s5 = inlined_call_operand.vmem [shape: f32[2,256], index: 5, kind: output, shape index: {1}]
  %6 = xla_tuple %s4, %s5
  %s7 = sld [smem:[#allocation0]]
  $region34: #{_postprocess_core.1} parent=0
    _
  %s9 = ssub.s32 1, %s7
  %s10 = scalar_select 0, %s9, %s7
  // Predicated region
  $region2: #{_postprocess_core.1} parent=0 // pred_check
    _
  $region3: #{_postprocess_core.1} parent=0 // pred_check_branch
    %12 = sbr.rel (0) target = $region5
  $region4: #{_postprocess_core.1} parent=0 // pred_region
    _
  $region5: #{_postprocess_core.1} parent=0 // pred_fallthru
    _
  // Predicated region
  $region6: #{_postprocess_core.1} parent=0 // pred_check
    _
  $region7: #{_postprocess_core.1} parent=0 // pred_check_branch
    %14 = sbr.rel (0) target = $region9
  $region8: #{_postprocess_core.1} parent=0 // pred_region
    _
  $region9: #{_postprocess_core.1} parent=0 // pred_fallthru
    _
  // Predicated region
  $region10: #{_postprocess_core.1} parent=0 // pred_check
    _
  $region11: #{_postprocess_core.1} parent=0 // pred_check_branch
    %16 = sbr.rel (0) target = $region13
  $region12: #{_postprocess_core.1} parent=0 // pred_region
    _
  $region13: #{_postprocess_core.1} parent=0 // pred_fallthru
    _
  // Predicated region
  $region14: #{_postprocess_core.1} parent=0 // pred_check
    _
  $region15: #{_postprocess_core.1} parent=0 // pred_check_branch
    %18 = sbr.rel (0) target = $region17
  $region16: #{_postprocess_core.1} parent=0 // pred_region
    _
  $region17: #{_postprocess_core.1} parent=0 // pred_fallthru
    _
  %v19 = vld [vmem:[%s1] sm:$0xff]
  %v20 = vld [vmem:[%s1 + $0x8] sm:$0xff]
  %v21 = vadd.f32 %v19, 1e-09
  %v22 = vadd.f32 %v20, 1e-09
  %v23 = vrcp.pop %v21
  %v24 = vmul.f32 %v21, %v23
  %v25 = vsub.f32 1.0, %v24
  %v26 = vmul.f32 %v23, %v25
  %v27 = vadd.f32 %v23, %v26
  %vm28 = vweird.f32 %v21
  %vm29 = vweird.f32 %v23
  %vm30 = vmor %vm28, %vm29
  %v31 = vsel %vm30, %v23, %v27
  %v32 = vand.u32 2147483647, %v21
  %vm33 = vcmp.eq.f32.partialorder %v32, 8.507059e+37
  %v34 = vand.u32 %v21, 2147483648
  %v35 = vor.u32 1.1754944e-38, %v34
  %v36 = vsel %vm33, %v35, %v31
  %v37 = vmul.f32 1.0, %v36
  %v38 = vrcp.pop %v22
  %v39 = vmul.f32 %v22, %v38
  %v40 = vsub.f32 1.0, %v39
  %v41 = vmul.f32 %v38, %v40
  %v42 = vadd.f32 %v38, %v41
  %vm43 = vweird.f32 %v22
  %vm44 = vweird.f32 %v38
  %vm45 = vmor %vm43, %vm44
  %v46 = vsel %vm45, %v38, %v42
  %v47 = vand.u32 2147483647, %v22
  %vm48 = vcmp.eq.f32.partialorder %v47, 8.507059e+37
  %v49 = vand.u32 %v22, 2147483648
  %v50 = vor.u32 1.1754944e-38, %v49
  %v51 = vsel %vm48, %v50, %v46
  %v52 = vmul.f32 1.0, %v51
  %55 = vrot.lane.b32.xlu0 %v37, 1
  %v56 = vpop.permute.xlu0 %55
  %57 = vrot.lane.b32.xlu0 %v52, 1
  %v58 = vpop.permute.xlu0 %57
  %v61 = vmul.f32 %v19, %v56
  %v62 = vmul.f32 %v20, %v58
  %63 = vrot.lane.b32.xlu0 %v37, 2
  %v64 = vpop.permute.xlu0 %63
  %65 = vrot.lane.b32.xlu0 %v52, 2
  %v66 = vpop.permute.xlu0 %65
  %v69 = vmul.f32 %v19, %v64
  %v70 = vmul.f32 %v20, %v66
  %v71 = vld [vmem:[%s0] sm:$0xff]
  %v72 = vld [vmem:[%s0 + $0x8] sm:$0xff]
  %v73 = vld [vmem:[%s0 + $0x10] sm:$0xff]
  %v74 = vld [vmem:[%s0 + $0x18] sm:$0xff]
  %v75 = vld [vmem:[%s0 + $0x20] sm:$0xff]
  %v76 = vld [vmem:[%s0 + $0x28] sm:$0xff]
  %v77 = vld [vmem:[%s0 + $0x30] sm:$0xff]
  %v78 = vld [vmem:[%s0 + $0x38] sm:$0xff]
  %v79 = vld [vmem:[%s0 + $0x40] sm:$0xff]
  %v80 = vld [vmem:[%s0 + $0x48] sm:$0xff]
  %v81 = vld [vmem:[%s0 + $0x50] sm:$0xff]
  %v82 = vld [vmem:[%s0 + $0x58] sm:$0xff]
  %83 = vset.pattern.permute.xlu0 0
  %84 = vperm.xlu0 %83, %v37
  %v85 = vpop.permute.xlu0 %84
  %87 = vset.pattern.permute.xlu0 0
  %88 = vperm.xlu0 %87, %v52
  %v89 = vpop.permute.xlu0 %88
  %v91 = vadd.f32 %v75, %v85
  %v92 = vadd.f32 %v76, %v85
  %v93 = vadd.f32 %v81, %v89
  %v94 = vadd.f32 %v82, %v89
  %v95 = vrcp.pop %v91
  %v96 = vmul.f32 %v91, %v95
  %v97 = vsub.f32 1.0, %v96
  %v98 = vmul.f32 %v95, %v97
  %v99 = vadd.f32 %v95, %v98
  %vm100 = vweird.f32 %v91
  %vm101 = vweird.f32 %v95
  %vm102 = vmor %vm100, %vm101
  %v103 = vsel %vm102, %v95, %v99
  %v104 = vand.u32 2147483647, %v91
  %vm105 = vcmp.eq.f32.partialorder %v104, 8.507059e+37
  %v106 = vand.u32 %v91, 2147483648
  %v107 = vor.u32 1.1754944e-38, %v106
  %v108 = vsel %vm105, %v107, %v103
  %v109 = vmul.f32 1.0, %v108
  %v110 = vrcp.pop %v92
  %v111 = vmul.f32 %v92, %v110
  %v112 = vsub.f32 1.0, %v111
  %v113 = vmul.f32 %v110, %v112
  %v114 = vadd.f32 %v110, %v113
  %vm115 = vweird.f32 %v92
  %vm116 = vweird.f32 %v110
  %vm117 = vmor %vm115, %vm116
  %v118 = vsel %vm117, %v110, %v114
  %v119 = vand.u32 2147483647, %v92
  %vm120 = vcmp.eq.f32.partialorder %v119, 8.507059e+37
  %v121 = vand.u32 %v92, 2147483648
  %v122 = vor.u32 1.1754944e-38, %v121
  %v123 = vsel %vm120, %v122, %v118
  %v124 = vmul.f32 1.0, %v123
  %v125 = vrcp.pop %v93
  %v126 = vmul.f32 %v93, %v125
  %v127 = vsub.f32 1.0, %v126
  %v128 = vmul.f32 %v125, %v127
  %v129 = vadd.f32 %v125, %v128
  %vm130 = vweird.f32 %v93
  %vm131 = vweird.f32 %v125
  %vm132 = vmor %vm130, %vm131
  %v133 = vsel %vm132, %v125, %v129
  %v134 = vand.u32 2147483647, %v93
  %vm135 = vcmp.eq.f32.partialorder %v134, 8.507059e+37
  %v136 = vand.u32 %v93, 2147483648
  %v137 = vor.u32 1.1754944e-38, %v136
  %v138 = vsel %vm135, %v137, %v133
  %v139 = vmul.f32 1.0, %v138
  %v140 = vrcp.pop %v94
  %v141 = vmul.f32 %v94, %v140
  %v142 = vsub.f32 1.0, %v141
  %v143 = vmul.f32 %v140, %v142
  %v144 = vadd.f32 %v140, %v143
  %vm145 = vweird.f32 %v94
  %vm146 = vweird.f32 %v140
  %vm147 = vmor %vm145, %vm146
  %v148 = vsel %vm147, %v140, %v144
  %v149 = vand.u32 2147483647, %v94
  %vm150 = vcmp.eq.f32.partialorder %v149, 8.507059e+37
  %v151 = vand.u32 %v94, 2147483648
  %v152 = vor.u32 1.1754944e-38, %v151
  %v153 = vsel %vm150, %v152, %v148
  %v154 = vmul.f32 1.0, %v153
  %v155 = vld [vmem:[%s3] sm:$0x1]
  %v156 = vld [vmem:[%s3 + $0x1] sm:$0x1]
  %v157 = vld [vmem:[%s3 + $0x2] sm:$0x1]
  %v158 = vld [vmem:[%s3 + $0x3] sm:$0x1]
  %160 = vset.pattern.permute.xlu0 1
  %161 = vperm.xlu0 %160, %v61
  %v162 = vpop.permute.xlu0 %161
  %165 = vset.pattern.permute.xlu0 1
  %166 = vperm.xlu0 %165, %v62
  %v167 = vpop.permute.xlu0 %166
  %v169 = vadd.f32 %v71, %v162
  %v170 = vadd.f32 %v72, %v162
  %v171 = vadd.f32 %v77, %v167
  %v172 = vadd.f32 %v78, %v167
  %v173 = vmul.f32 %v169, %v109
  %v174 = vmul.f32 %v170, %v124
  %v175 = vmul.f32 %v171, %v139
  %v176 = vmul.f32 %v172, %v154
  %v177 = vmul.f32 %v173, 5000.0
  %v178 = vmul.f32 %v174, 5000.0
  %v179 = vmul.f32 %v175, 5000.0
  %v180 = vmul.f32 %v176, 5000.0
  %v183 = vperm.slane %v155, 0
  %v184 = vperm.slane %v157, 0
  %185 = vset.pattern.permute.xlu0 0
  %186 = vperm.xlu0 %185, %v183
  %v187 = vpop.permute.xlu0 %186
  %189 = vset.pattern.permute.xlu0 0
  %190 = vperm.xlu0 %189, %v184
  %v191 = vpop.permute.xlu0 %190
  %v193 = vadd.f32 %v177, %v187
  %v194 = vadd.f32 %v178, %v187
  %v195 = vadd.f32 %v179, %v191
  %v196 = vadd.f32 %v180, %v191
  %197 = vst [vmem:[%s4] sm:$0xff] %v193
  %vm198 = vcmask 130048
  %199 = vst.msk [vmem:[%s4 + $0x8] sm:$0xff] %vm198, %v194
  %200 = vst [vmem:[%s4 + $0x20] sm:$0xff] %v195
  %201 = vst.msk [vmem:[%s4 + $0x28] sm:$0xff] %vm198, %v196
  %203 = vset.pattern.permute.xlu0 2
  %204 = vperm.xlu0 %203, %v69
  %v205 = vpop.permute.xlu0 %204
  %208 = vset.pattern.permute.xlu0 2
  %209 = vperm.xlu0 %208, %v70
  %v210 = vpop.permute.xlu0 %209
  %v212 = vadd.f32 %v73, %v205
  %v213 = vadd.f32 %v74, %v205
  %v214 = vadd.f32 %v79, %v210
  %v215 = vadd.f32 %v80, %v210
  %v216 = vmul.f32 %v212, %v109
  %v217 = vmul.f32 %v213, %v124
  %v218 = vmul.f32 %v214, %v139
  %v219 = vmul.f32 %v215, %v154
  %v220 = vmul.f32 %v216, 5000.0
  %v221 = vmul.f32 %v217, 5000.0
  %v222 = vmul.f32 %v218, 5000.0
  %v223 = vmul.f32 %v219, 5000.0
  %v226 = vperm.slane %v156, 0
  %v227 = vperm.slane %v158, 0
  %228 = vset.pattern.permute.xlu0 0
  %229 = vperm.xlu0 %228, %v226
  %v230 = vpop.permute.xlu0 %229
  %232 = vset.pattern.permute.xlu0 0
  %233 = vperm.xlu0 %232, %v227
  %v234 = vpop.permute.xlu0 %233
  %v236 = vadd.f32 %v220, %v230
  %v237 = vadd.f32 %v221, %v230
  %v238 = vadd.f32 %v222, %v234
  %v239 = vadd.f32 %v223, %v234
  %s240 = scalar_lea.vmem %s4, 16
  %241 = vst [vmem:[%s240] sm:$0xff] %v236
  %242 = vst.msk [vmem:[%s240 + $0x8] sm:$0xff] %vm198, %v237
  %243 = vst [vmem:[%s240 + $0x20] sm:$0xff] %v238
  %244 = vst.msk [vmem:[%s240 + $0x28] sm:$0xff] %vm198, %v239
  %v245 = vld [vmem:[%s2] sm:$0x77]
  %v246 = vld [vmem:[%s2 + $0x8] sm:$0x77]
  %v247 = vlaneseq
  %v248 = vand.u32 %v247, 127
  %v249 = vadd.s32 %v248, 128
  %vm250 = vcmp.lt.s32.totalorder %v248, 0
  %v251 = vsub.s32 0, %v248
  %v252 = vsel %vm250, %v251, %v248
  %v253 = vshrl.u32 %v252, 2
  %v254 = vand.u32 %v252, 3
  %v255 = vsub.s32 0, %v254
  %v256 = vsel %vm250, %v255, %v254
  %vm257 = vcmp.lt.s32.totalorder %v249, 0
  %v258 = vsub.s32 0, %v249
  %v259 = vsel %vm257, %v258, %v249
  %v260 = vshrl.u32 %v259, 2
  %v261 = vand.u32 %v259, 3
  %v262 = vsub.s32 0, %v261
  %v263 = vsel %vm257, %v262, %v261
  %vm264 = vcmp.ne.s32.totalorder %v256, 0
  %vm265 = vcmp.ne.s32.totalorder %v263, 0
  %vm266 = vcmp.lt.s32.totalorder %v256, 0
  %vm267 = vcmp.lt.s32.totalorder %v263, 0
  %vm268 = vmand %vm266, %vm264
  %vm269 = vmand %vm267, %vm265
  %v270 = vadd.s32 %v256, 4
  %v271 = vadd.s32 %v263, 4
  %v272 = vsel %vm268, %v270, %v256
  %v273 = vsel %vm269, %v271, %v263
  %vm274 = vcmp.lt.s32.totalorder %v272, 2
  %vm275 = vcmp.lt.s32.totalorder %v273, 2
  %v276 = vsel %vm274, -0.5, 0.5
  %v277 = vsel %vm275, -0.5, 0.5
  %v280 = vperm.slane %v245, 1
  %v281 = vperm.slane %v245, 5
  %v282 = vperm.slane %v246, 1
  %v283 = vperm.slane %v246, 5
  %vm284 = vcmask 1041409
  %v285 = vsel %vm284, %v282, %v280
  %v286 = vsel %vm284, %v283, %v281
  %v289 = vmul.f32 %v276, %v285
  %v290 = vmul.f32 %v277, %v286
  %v293 = vrot.slane %v290, 4
  %vm294 = vcmask 1043456
  %v295 = vsel %vm294, %v289, %v293
  %v296 = vrot.slane %v295, 1
  %v299 = vadd.f32 %v245, %v295
  %v300 = vadd.f32 %v246, %v296
  %vm301 = vcmp.lt.s32.totalorder %v248, 128
  %vm302 = vcmp.lt.s32.totalorder %v249, 128
  %v303 = vrot.slane %v245, 6
  %v304 = vrot.slane %v303, 4
  %v305 = vrot.slane %v246, 6
  %v306 = vrot.slane %v305, 4
  %v309 = vmul.f32 %v299, %v304
  %v310 = vmul.f32 %v300, %v306
  %v311 = vrcp.pop %v304
  %v312 = vmul.f32 %v304, %v311
  %v313 = vsub.f32 1.0, %v312
  %v314 = vmul.f32 %v311, %v313
  %v315 = vadd.f32 %v311, %v314
  %vm316 = vweird.f32 %v304
  %vm317 = vweird.f32 %v311
  %vm318 = vmor %vm316, %vm317
  %v319 = vsel %vm318, %v311, %v315
  %v320 = vand.u32 2147483647, %v304
  %vm321 = vcmp.eq.f32.partialorder %v320, 8.507059e+37
  %v322 = vand.u32 %v304, 2147483648
  %v323 = vor.u32 1.1754944e-38, %v322
  %v324 = vsel %vm321, %v323, %v319
  %v325 = vmul.f32 %v299, %v324
  %v326 = vrcp.pop %v306
  %v327 = vmul.f32 %v306, %v326
  %v328 = vsub.f32 1.0, %v327
  %v329 = vmul.f32 %v326, %v328
  %v330 = vadd.f32 %v326, %v329
  %vm331 = vweird.f32 %v306
  %vm332 = vweird.f32 %v326
  %vm333 = vmor %vm331, %vm332
  %v334 = vsel %vm333, %v326, %v330
  %v335 = vand.u32 2147483647, %v306
  %vm336 = vcmp.eq.f32.partialorder %v335, 8.507059e+37
  %v337 = vand.u32 %v306, 2147483648
  %v338 = vor.u32 1.1754944e-38, %v337
  %v339 = vsel %vm336, %v338, %v334
  %v340 = vmul.f32 %v300, %v339
  %v343 = vperm.slane %v309, 0
  %v344 = vperm.slane %v309, 4
  %v345 = vperm.slane %v310, 0
  %v346 = vperm.slane %v310, 4
  %v347 = vsel %vm284, %v345, %v343
  %v348 = vsel %vm284, %v346, %v344
  %v353 = vperm.slane %v325, 0
  %v354 = vperm.slane %v325, 4
  %v355 = vperm.slane %v340, 0
  %v356 = vperm.slane %v340, 4
  %v357 = vsel %vm284, %v355, %v353
  %v358 = vsel %vm284, %v356, %v354
  %v361 = vsel %vm301, %v347, %v357
  %v362 = vsel %vm302, %v348, %v358
  %v365 = vrot.slane %v362, 6
  %vm366 = vcmask 1041408
  %v367 = vsel %vm366, %v361, %v365
  %369 = vst [vmem:[%s5] sm:$0xf] %v367
  // Predicated region
  $region18: #{_postprocess_core.1} parent=0 // pred_check
    _
  $region19: #{_postprocess_core.1} parent=0 // pred_check_branch
    %371 = sbr.rel (0) target = $region21
  $region20: #{_postprocess_core.1} parent=0 // pred_region
    _
  $region21: #{_postprocess_core.1} parent=0 // pred_fallthru
    _
  // Predicated region
  $region22: #{_postprocess_core.1} parent=0 // pred_check
    _
  $region23: #{_postprocess_core.1} parent=0 // pred_check_branch
    %373 = sbr.rel (0) target = $region25
  $region24: #{_postprocess_core.1} parent=0 // pred_region
    _
  $region25: #{_postprocess_core.1} parent=0 // pred_fallthru
    _
  // Predicated region
  $region26: #{_postprocess_core.1} parent=0 // pred_check
    _
  $region27: #{_postprocess_core.1} parent=0 // pred_check_branch
    %375 = sbr.rel (0) target = $region29
  $region28: #{_postprocess_core.1} parent=0 // pred_region
    _
  $region29: #{_postprocess_core.1} parent=0 // pred_fallthru
    _
  // Predicated region
  $region30: #{_postprocess_core.1} parent=0 // pred_check
    _
  $region31: #{_postprocess_core.1} parent=0 // pred_check_branch
    %377 = sbr.rel (0) target = $region33
  $region32: #{_postprocess_core.1} parent=0 // pred_region
    _
  $region33: #{_postprocess_core.1} parent=0 // pred_fallthru
    _

</llo_original>
